<compile_context>
chip_gen: v5e
topology: v5e:2x2
jax: 0.10.0
libtpu: 0.0.40
codegen_flags: <defaults>
</compile_context>

<pallas_src>
import jax
import jax.numpy as jnp
from jax.experimental import pallas as pl
from jax.experimental.pallas import tpu as pltpu

_NEG_BIG = -1e30  # finite padding value: never wins the max, exp underflows to 0


def _make_ce_kernel(c_total, bc, needs_c_mask):
    """Build the kernel with the real class count baked in as a constant."""

    def _ce_kernel(logits_ref, labels_ref, nll_ref, m_sc, l_sc, p_sc):
        # logits_ref: (bn, bc) float (f32/bf16/f16) VMEM tile
        # labels_ref: (bn, 1) int32 VMEM tile (constant across the C axis)
        # nll_ref:    (bn, 1) f32 per-row NLL (written once, at last C step)
        # m_sc/l_sc/p_sc: (bn, 1) f32 scratch: running max / exp-sum / picked logit
        k = pl.program_id(1)
        nk = pl.num_programs(1)

        @pl.when(k == 0)
        def _init():
            m_sc[...] = jnp.full_like(m_sc, _NEG_BIG)
            l_sc[...] = jnp.zeros_like(l_sc)
            p_sc[...] = jnp.zeros_like(p_sc)

        x = logits_ref[...].astype(jnp.float32)                 # (bn, bc)
        bn = x.shape[0]
        col_ids = jax.lax.broadcasted_iota(jnp.int32, (bn, bc), 1)

        if needs_c_mask:
            # Ragged C tail: lanes at global column >= c_total hold garbage
            # (no wrapper pad).  Replace with a finite large-negative so the
            # max/exp ignore them and any NaN garbage cannot propagate.
            valid = col_ids < (c_total - k * bc)
            x = jnp.where(valid, x, _NEG_BIG)

        # --- online logsumexp update for this C tile ---
        m_prev = m_sc[...]
        m_new = jnp.maximum(m_prev, jnp.max(x, axis=-1, keepdims=True))
        alpha = jnp.exp(m_prev - m_new)                          # rescale old sum
        p = jnp.exp(x - m_new)                                   # EUP
        l_sc[...] = alpha * l_sc[...] + jnp.sum(p, axis=-1, keepdims=True)
        m_sc[...] = m_new

        # --- fused target-logit gather (labels hit exactly one C tile) ---
        # Shift the (bn,1) labels by the tile's column offset instead of adding
        # k*bc to the full (bn,bc) iota (one less full-tile integer add).
        labels_local = labels_ref[...] - k * bc                  # (bn, 1) int32
        onehot = col_ids == labels_local                         # (bn, bc) bool
        p_sc[...] += jnp.sum(jnp.where(onehot, x, 0.0), axis=-1, keepdims=True)

        @pl.when(k == nk - 1)
        def _finalize():
            # per-row NLL = logsumexp(logits) - logits[label]
            nll_ref[...] = m_sc[...] + jnp.log(l_sc[...]) - p_sc[...]

    return _ce_kernel


def _round_up(x, m):
    return ((x + m - 1) // m) * m


def fasttext_loss(predict_score, label_idx, *, block_n=512, block_c=None):
    """predict_score: (N, C) float; label_idx: (N, 1) int -> scalar f32 mean CE."""
    n, c = predict_score.shape

    # Native bf16/f16 ingestion (halves HBM bytes); everything else -> f32.
    # (f64 explicitly downcast: TPU Pallas does not take float64.)
    if predict_score.dtype not in (jnp.float32, jnp.bfloat16, jnp.float16):
        predict_score = predict_score.astype(jnp.float32)
    labels = label_idx.astype(jnp.int32).reshape(n, 1)

    itemsize = predict_score.dtype.itemsize
    if block_c is None:
        block_c = 2048 if itemsize >= 4 else 4096   # ~4 MiB logits tile

    # Tile sizes: (8,128)-aligned blocks (blocks may overhang the array; the
    # ragged tails are handled in-kernel / by Pallas' masked output writes).
    bn = max(8, min(block_n, _round_up(n, 8)))
    bc = max(128, min(block_c, _round_up(c, 128)))
    # v7x megacore: make sure the "parallel" N axis has >= 2 blocks when there
    # is enough work for both TensorCores.
    if n > 256 and n <= bn:
        bn = max(128, _round_up(-(-n // 2), 8))

    grid = (pl.cdiv(n, bn), pl.cdiv(c, bc))
    needs_c_mask = (c % bc) != 0

    cost = pl.CostEstimate(
        flops=6 * n * c,
        transcendentals=n * c,
        bytes_accessed=n * c * itemsize + n * 4 + n * 4,
    )

    per_row_nll = pl.pallas_call(
        _make_ce_kernel(c, bc, needs_c_mask),
        out_shape=jax.ShapeDtypeStruct((n, 1), jnp.float32),
        grid_spec=pltpu.PrefetchScalarGridSpec(
            num_scalar_prefetch=0,
            grid=grid,
            in_specs=[
                pl.BlockSpec((bn, bc), lambda i, k: (i, k)),   # logits tile
                pl.BlockSpec((bn, 1), lambda i, k: (i, 0)),    # labels: N only
            ],
            out_specs=pl.BlockSpec((bn, 1), lambda i, k: (i, 0)),
            scratch_shapes=[
                pltpu.VMEM((bn, 1), jnp.float32),   # running max
                pltpu.VMEM((bn, 1), jnp.float32),   # running exp-sum
                pltpu.VMEM((bn, 1), jnp.float32),   # picked target logit
            ],
        ),
        compiler_params=pltpu.CompilerParams(
            dimension_semantics=("parallel", "arbitrary"),
            vmem_limit_bytes=48 << 20,   # <= v7x's 64 MiB physical; fine on v5e/v6e
        ),
        cost_estimate=cost,
    )(predict_score, labels)

    # Output has exactly N rows (partial-block OOB writes are dropped by
    # Pallas), so the global mean is a plain mean.
    return jnp.mean(per_row_nll)


def _reference_loss(predict_score, label_idx):
    labels = jnp.squeeze(label_idx, axis=1)
    logp = jax.nn.log_softmax(predict_score.astype(jnp.float32), axis=-1)
    nll = -jnp.take_along_axis(logp, labels[:, None], axis=-1)[:, 0]
    return jnp.mean(nll)


if __name__ == "__main__":
    key = jax.random.PRNGKey(0)
    k1, k2, k3, k4, k5, k6 = jax.random.split(key, 6)

    # Small fasttext-style shapes (primary check).
    N, C = 8, 32
    predict_score = jax.random.normal(k1, (N, C), dtype=jnp.float32)
    label_idx = jax.random.randint(k2, (N, 1), 0, C, dtype=jnp.int32)
    loss = fasttext_loss(predict_score, label_idx)
    jax.block_until_ready(loss)
    ref = _reference_loss(predict_score, label_idx)
    assert jnp.allclose(loss, ref, atol=1e-5, rtol=1e-5), (loss, ref)

    # Unaligned N and C: exercises partial N block, ragged-C masking and the
    # streaming logsumexp across multiple C tiles (no wrapper-side padding).
    N2, C2 = 52, 300
    ps2 = jax.random.normal(k3, (N2, C2), dtype=jnp.float32) * 3.0
    li2 = jax.random.randint(k4, (N2, 1), 0, C2, dtype=jnp.int32)
    loss2 = fasttext_loss(ps2, li2, block_n=16, block_c=128)
    jax.block_until_ready(loss2)
    ref2 = _reference_loss(ps2, li2)
    assert jnp.allclose(loss2, ref2, atol=1e-4, rtol=1e-4), (loss2, ref2)

    # bf16 ingestion path (kernel upcasts to f32 internally).
    N3, C3 = 24, 200
    ps3 = (jax.random.normal(k5, (N3, C3), dtype=jnp.float32) * 2.0).astype(jnp.bfloat16)
    li3 = jax.random.randint(k6, (N3, 1), 0, C3, dtype=jnp.int32)
    loss3 = fasttext_loss(ps3, li3)
    jax.block_until_ready(loss3)
    ref3 = _reference_loss(ps3, li3)
    assert jnp.allclose(loss3, ref3, atol=1e-3, rtol=1e-3), (loss3, ref3)

    # TODO(synk): PyTorch raises on out-of-range labels; here out-of-range
    # labels silently contribute picked-logit 0 (labels assumed valid in [0, C)).
    print("KERNEL_OK")
</pallas_src>

<mosaic_0001>
module attributes {stable_mosaic.version = 11 : i64} {
  func.func @_ce_kernel(%arg0: i32, %arg1: i32, %arg2: memref<8x128xf32, #tpu.memory_space<vmem>>, %arg3: memref<8x1xi32, #tpu.memory_space<vmem>>, %arg4: memref<8x1xf32, #tpu.memory_space<vmem>>, %arg5: memref<8x1xf32, #tpu.memory_space<vmem>>, %arg6: memref<8x1xf32, #tpu.memory_space<vmem>>, %arg7: memref<8x1xf32, #tpu.memory_space<vmem>>) attributes {dimension_semantics = [#tpu.dimension_semantics<parallel>, #tpu.dimension_semantics<arbitrary>], iteration_bounds = array<i64: 1, 1>, scalar_prefetch = 0 : i64, scratch_operands = 3 : i64, tpu.core_type = #tpu.core_type<tc>, window_params = [{transform_indices = @transform_0, window_bounds = array<i64: 8, 128>}, {transform_indices = @transform_1, window_bounds = array<i64: 8, 1>}, {transform_indices = @transform_2, window_bounds = array<i64: 8, 1>}]} {
    %c0_i32 = arith.constant 0 : i32
    %0 = arith.cmpi eq, %arg1, %c0_i32 : i32
    %1 = arith.extui %0 : i1 to i32
    %c0_i32_0 = arith.constant 0 : i32
    %2 = arith.cmpi ne, %1, %c0_i32_0 : i32
    scf.if %2 {
      %cst_23 = arith.constant -1.000000e+30 : f32
      %43 = vector.broadcast %cst_23 : f32 to vector<8x1xf32>
      %c0_24 = arith.constant 0 : index
      %c0_25 = arith.constant 0 : index
      %44 = vector.load %arg5[%c0_24, %c0_25] : memref<8x1xf32, #tpu.memory_space<vmem>>, vector<8x1xf32>
      tpu.vector_store %arg5[%c0_24, %c0_25], %43 {strides = array<i32>} : memref<8x1xf32, #tpu.memory_space<vmem>>, vector<8x1xf32>,
      %cst_26 = arith.constant 0.000000e+00 : f32
      %45 = vector.broadcast %cst_26 : f32 to vector<8x1xf32>
      %c0_27 = arith.constant 0 : index
      %c0_28 = arith.constant 0 : index
      %46 = vector.load %arg6[%c0_27, %c0_28] : memref<8x1xf32, #tpu.memory_space<vmem>>, vector<8x1xf32>
      tpu.vector_store %arg6[%c0_27, %c0_28], %45 {strides = array<i32>} : memref<8x1xf32, #tpu.memory_space<vmem>>, vector<8x1xf32>,
      %cst_29 = arith.constant 0.000000e+00 : f32
      %47 = vector.broadcast %cst_29 : f32 to vector<8x1xf32>
      %c0_30 = arith.constant 0 : index
      %c0_31 = arith.constant 0 : index
      %48 = vector.load %arg7[%c0_30, %c0_31] : memref<8x1xf32, #tpu.memory_space<vmem>>, vector<8x1xf32>
      tpu.vector_store %arg7[%c0_30, %c0_31], %47 {strides = array<i32>} : memref<8x1xf32, #tpu.memory_space<vmem>>, vector<8x1xf32>,
    } else {
    }
    %c0 = arith.constant 0 : index
    %c0_1 = arith.constant 0 : index
    %3 = vector.load %arg2[%c0, %c0_1] : memref<8x128xf32, #tpu.memory_space<vmem>>, vector<8x128xf32>
    %4 = tpu.iota {dimensions = array<i32: 1>} : vector<8x128xi32>
    %c128_i32 = arith.constant 128 : i32
    %5 = arith.muli %arg1, %c128_i32 : i32
    %c32_i32 = arith.constant 32 : i32
    %6 = arith.subi %c32_i32, %5 : i32
    %7 = vector.broadcast %6 : i32 to vector<8x128xi32>
    %8 = arith.cmpi slt, %4, %7 : vector<8x128xi32>
    %cst = arith.constant -1.000000e+30 : f32
    %9 = vector.broadcast %cst : f32 to vector<8x128xf32>
    %10 = arith.select %8, %3, %9 : vector<8x128xi1>, vector<8x128xf32>
    %c0_2 = arith.constant 0 : index
    %c0_3 = arith.constant 0 : index
    %11 = vector.load %arg5[%c0_2, %c0_3] : memref<8x1xf32, #tpu.memory_space<vmem>>, vector<8x1xf32>
    %cst_4 = arith.constant dense<0xFF800000> : vector<8xf32>
    %12 = vector.multi_reduction <maximumf>, %10, %cst_4 [1] : vector<8x128xf32> to vector<8xf32>
    %13 = vector.shape_cast %12 : vector<8xf32> to vector<8x1xf32>
    %14 = arith.maximumf %11, %13 : vector<8x1xf32>
    %15 = arith.subf %11, %14 : vector<8x1xf32>
    %16 = math.exp %15 : vector<8x1xf32>
    %17 = vector.broadcast %14 : vector<8x1xf32> to vector<8x128xf32>
    %18 = arith.subf %10, %17 : vector<8x128xf32>
    %19 = math.exp %18 : vector<8x128xf32>
    %c0_5 = arith.constant 0 : index
    %c0_6 = arith.constant 0 : index
    %20 = vector.load %arg6[%c0_5, %c0_6] : memref<8x1xf32, #tpu.memory_space<vmem>>, vector<8x1xf32>
    %21 = arith.mulf %16, %20 : vector<8x1xf32>
    %cst_7 = arith.constant dense<0.000000e+00> : vector<8xf32>
    %22 = vector.multi_reduction <add>, %19, %cst_7 [1] : vector<8x128xf32> to vector<8xf32>
    %23 = vector.shape_cast %22 : vector<8xf32> to vector<8x1xf32>
    %24 = arith.addf %21, %23 : vector<8x1xf32>
    %c0_8 = arith.constant 0 : index
    %c0_9 = arith.constant 0 : index
    %25 = vector.load %arg6[%c0_8, %c0_9] : memref<8x1xf32, #tpu.memory_space<vmem>>, vector<8x1xf32>
    tpu.vector_store %arg6[%c0_8, %c0_9], %24 {strides = array<i32>} : memref<8x1xf32, #tpu.memory_space<vmem>>, vector<8x1xf32>,
    %c0_10 = arith.constant 0 : index
    %c0_11 = arith.constant 0 : index
    %26 = vector.load %arg5[%c0_10, %c0_11] : memref<8x1xf32, #tpu.memory_space<vmem>>, vector<8x1xf32>
    tpu.vector_store %arg5[%c0_10, %c0_11], %14 {strides = array<i32>} : memref<8x1xf32, #tpu.memory_space<vmem>>, vector<8x1xf32>,
    %c0_12 = arith.constant 0 : index
    %c0_13 = arith.constant 0 : index
    %27 = vector.load %arg3[%c0_12, %c0_13] : memref<8x1xi32, #tpu.memory_space<vmem>>, vector<8x1xi32>
    %c128_i32_14 = arith.constant 128 : i32
    %28 = arith.muli %arg1, %c128_i32_14 : i32
    %29 = vector.broadcast %28 : i32 to vector<8x1xi32>
    %30 = arith.subi %27, %29 : vector<8x1xi32>
    %31 = vector.broadcast %30 : vector<8x1xi32> to vector<8x128xi32>
    %32 = arith.cmpi eq, %4, %31 : vector<8x128xi32>
    %c0_15 = arith.constant 0 : index
    %c0_16 = arith.constant 0 : index
    %33 = vector.load %arg7[%c0_15, %c0_16] : memref<8x1xf32, #tpu.memory_space<vmem>>, vector<8x1xf32>
    %cst_17 = arith.constant 0.000000e+00 : f32
    %34 = vector.broadcast %cst_17 : f32 to vector<8x128xf32>
    %35 = arith.select %32, %10, %34 : vector<8x128xi1>, vector<8x128xf32>
    %cst_18 = arith.constant dense<0.000000e+00> : vector<8xf32>
    %36 = vector.multi_reduction <add>, %35, %cst_18 [1] : vector<8x128xf32> to vector<8xf32>
    %37 = vector.shape_cast %36 : vector<8xf32> to vector<8x1xf32>
    %38 = arith.addf %33, %37 : vector<8x1xf32>
    %c0_19 = arith.constant 0 : index
    %c0_20 = arith.constant 0 : index
    %39 = vector.load %arg7[%c0_19, %c0_20] : memref<8x1xf32, #tpu.memory_space<vmem>>, vector<8x1xf32>
    tpu.vector_store %arg7[%c0_19, %c0_20], %38 {strides = array<i32>} : memref<8x1xf32, #tpu.memory_space<vmem>>, vector<8x1xf32>,
    %c0_i32_21 = arith.constant 0 : i32
    %40 = arith.cmpi eq, %arg1, %c0_i32_21 : i32
    %41 = arith.extui %40 : i1 to i32
    %c0_i32_22 = arith.constant 0 : i32
    %42 = arith.cmpi ne, %41, %c0_i32_22 : i32
    scf.if %42 {
      %c0_23 = arith.constant 0 : index
      %c0_24 = arith.constant 0 : index
      %43 = vector.load %arg5[%c0_23, %c0_24] : memref<8x1xf32, #tpu.memory_space<vmem>>, vector<8x1xf32>
      %c0_25 = arith.constant 0 : index
      %c0_26 = arith.constant 0 : index
      %44 = vector.load %arg6[%c0_25, %c0_26] : memref<8x1xf32, #tpu.memory_space<vmem>>, vector<8x1xf32>
      %45 = math.log %44 : vector<8x1xf32>
      %46 = arith.addf %43, %45 : vector<8x1xf32>
      %c0_27 = arith.constant 0 : index
      %c0_28 = arith.constant 0 : index
      %47 = vector.load %arg7[%c0_27, %c0_28] : memref<8x1xf32, #tpu.memory_space<vmem>>, vector<8x1xf32>
      %48 = arith.subf %46, %47 : vector<8x1xf32>
      %c0_29 = arith.constant 0 : index
      %c0_30 = arith.constant 0 : index
      %49 = vector.load %arg4[%c0_29, %c0_30] : memref<8x1xf32, #tpu.memory_space<vmem>>, vector<8x1xf32>
      tpu.vector_store %arg4[%c0_29, %c0_30], %48 {strides = array<i32>} : memref<8x1xf32, #tpu.memory_space<vmem>>, vector<8x1xf32>,
    } else {
    }
    return
  }
  func.func @transform_0(%arg0: i32, %arg1: i32) -> (i32, i32) {
    %c0_i32 = arith.constant 0 : i32
    return %arg0, %arg1 : i32, i32
  }
  func.func @transform_1(%arg0: i32, %arg1: i32) -> (i32, i32) {
    %c0_i32 = arith.constant 0 : i32
    %c0_i32_0 = arith.constant 0 : i32
    return %arg0, %c0_i32 : i32, i32
  }
  func.func @transform_2(%arg0: i32, %arg1: i32) -> (i32, i32) {
    %c0_i32 = arith.constant 0 : i32
    %c0_i32_0 = arith.constant 0 : i32
    return %arg0, %c0_i32 : i32, i32
  }
}

</mosaic_0001>

<llo_original>
// kernel: tpu_custom_call.1
$region0: #{tpu_custom_call.1}
  #allocation0 [shape = 'u32[]', space=smem, size = 0x4, offset = 0x4, fixed_abs, tag = 'smem constant byte address 0x4 - core index']
  #allocation1 [shape = 'u32[72,128]{1,0:T(1,128)}', space=vmem, size = 0x9000, scoped, tag = 'internal scratch']
  #allocation2 [shape = 'f32[8,1]{1,0:T(8,128)}', space=vmem, size = 0x1000, scoped, tag = 'scratch operand']
  #allocation3 [shape = 'f32[8,1]{1,0:T(8,128)}', space=vmem, size = 0x1000, scoped, tag = 'scratch operand']
  #allocation4 [shape = 'f32[8,1]{1,0:T(8,128)}', space=vmem, size = 0x1000, scoped, tag = 'scratch operand']
  %s0 = inlined_call_operand.vmem [shape: f32[8,32], index: 0, kind: input, shape index: {}]
  %s1 = inlined_call_operand.vmem [shape: s32[8,1], index: 1, kind: input, shape index: {}]
  %s2 = inlined_call_operand.vmem [shape: f32[8,1], index: 2, kind: output, shape index: {}]
  %s3 = sld [smem:[#allocation0]]
  $region26: #{tpu_custom_call.1} parent=0
    _
  %s5 = ssub.s32 1, %s3
  %s6 = scalar_select 0, %s5, %s3
  // Predicated region
  $region2: #{tpu_custom_call.1} parent=0 // pred_check
    _
  $region3: #{tpu_custom_call.1} parent=0 // pred_check_branch
    %8 = sbr.rel (0) target = $region5
  $region4: #{tpu_custom_call.1} parent=0 // pred_region
    _
  $region5: #{tpu_custom_call.1} parent=0 // pred_fallthru
    _
  // Predicated region
  $region6: #{tpu_custom_call.1} parent=0 // pred_check
    _
  $region7: #{tpu_custom_call.1} parent=0 // pred_check_branch
    %10 = sbr.rel (0) target = $region9
  $region8: #{tpu_custom_call.1} parent=0 // pred_region
    _
  $region9: #{tpu_custom_call.1} parent=0 // pred_fallthru
    _
  %p11 = scmp.eq.s32.totalorder 0, 0
  // Predicated region
  $region10: #{tpu_custom_call.1} parent=0 // pred_check
    %p12 = pneg %p11
  $region11: #{tpu_custom_call.1} parent=0 // pred_check_branch
    %14 = sbr.rel (%p12) target = $region13
  $region12: #{tpu_custom_call.1} parent=0 // pred_region
    %vm15 = vcmask 7168
    %16 = vst.msk [vmem:[#allocation2] sm:$0xff] %vm15, -1e+30
    %17 = vst.msk [vmem:[#allocation3] sm:$0xff] %vm15, 0.0
    %18 = vst.msk [vmem:[#allocation4] sm:$0xff] %vm15, 0.0
  $region13: #{tpu_custom_call.1} parent=0 // pred_fallthru
    _
  %v19 = vld [vmem:[%s0] sm:$0xff]
  %v20 = vlaneseq
  %v21 = vand.u32 %v20, 127
  %s22 = smul.u32 0, 128
  %s23 = ssub.s32 32, %s22
  %v24 = vstv %s23
  %vm25 = vcmp.lt.s32.totalorder %v21, %v24
  %v26 = vsel %vm25, %v19, -1e+30
  %v27 = vld [vmem:[#allocation2] sm:$0xff]
  %28 = vmax.xlane.f32.xlu0 %v26
  %v29 = vpop.xlane.xlu0 %28
  %v30 = vmax.f32 %v27, %v29
  %v31 = vsub.f32 %v27, %v30
  %v32 = vmul.f32 %v31, 1.442695
  %v33 = vpow.pop %v32
  %35 = vset.pattern.permute.xlu0 0
  %36 = vperm.xlu0 %35, %v30
  %v37 = vpop.permute.xlu0 %36
  %v39 = vsub.f32 %v26, %v37
  %v40 = vmul.f32 %v39, 1.442695
  %v41 = vpow.pop %v40
  %v42 = vld [vmem:[#allocation3] sm:$0xff]
  %v43 = vmul.f32 %v33, %v42
  %44 = vadd.xlane.f32.xlu0 %v41
  %v45 = vpop.xlane.xlu0 %44
  %v46 = vadd.f32 %v43, %v45
  %vm47 = vcmask 7168
  %48 = vst.msk [vmem:[#allocation3] sm:$0xff] %vm47, %v46
  %49 = vst.msk [vmem:[#allocation2] sm:$0xff] %vm47, %v30
  %v50 = vld [vmem:[%s1] sm:$0xff]
  %v51 = vstv %s22
  %v52 = vsub.s32 %v50, %v51
  %53 = vset.pattern.permute.xlu0 0
  %54 = vperm.xlu0 %53, %v52
  %v55 = vpop.permute.xlu0 %54
  %vm56 = vcmp.eq.s32.totalorder %v21, %v55
  %v57 = vld [vmem:[#allocation4] sm:$0xff]
  %v58 = vsel %vm56, %v26, 0.0
  %59 = vadd.xlane.f32.xlu0 %v58
  %v60 = vpop.xlane.xlu0 %59
  %v61 = vadd.f32 %v57, %v60
  %62 = vst.msk [vmem:[#allocation4] sm:$0xff] %vm47, %v61
  // Predicated region
  $region14: #{tpu_custom_call.1} parent=0 // pred_check
    %p63 = pneg %p11
  $region15: #{tpu_custom_call.1} parent=0 // pred_check_branch
    %65 = sbr.rel (%p63) target = $region17
  $region16: #{tpu_custom_call.1} parent=0 // pred_region
    %v66 = vld [vmem:[#allocation2] sm:$0xff]
    %v67 = vld [vmem:[#allocation3] sm:$0xff]
    %v68 = vlog2.pop %v67
    %v69 = vmul.f32 %v68, 0.6931472
    %v70 = vadd.f32 %v66, %v69
    %v71 = vld [vmem:[#allocation4] sm:$0xff]
    %v72 = vsub.f32 %v70, %v71
    %73 = vst.msk [vmem:[%s2] sm:$0xff] %vm47, %v72
  $region17: #{tpu_custom_call.1} parent=0 // pred_fallthru
    _
  // Predicated region
  $region18: #{tpu_custom_call.1} parent=0 // pred_check
    _
  $region19: #{tpu_custom_call.1} parent=0 // pred_check_branch
    %75 = sbr.rel (0) target = $region21
  $region20: #{tpu_custom_call.1} parent=0 // pred_region
    _
  $region21: #{tpu_custom_call.1} parent=0 // pred_fallthru
    _
  // Predicated region
  $region22: #{tpu_custom_call.1} parent=0 // pred_check
    _
  $region23: #{tpu_custom_call.1} parent=0 // pred_check_branch
    %77 = sbr.rel (0) target = $region25
  $region24: #{tpu_custom_call.1} parent=0 // pred_region
    _
  $region25: #{tpu_custom_call.1} parent=0 // pred_fallthru
    _

</llo_original>
